<compile_context>
chip_gen: v7x
topology: tpu7x:2x2x1
jax: 0.10.0
libtpu: 0.0.40
codegen_flags: <defaults>
</compile_context>

<pallas_src>
import jax
import jax.numpy as jnp
from jax.experimental import pallas as pl
from jax.experimental.pallas import tpu as pltpu


# -----------------------------------------------------------------------------
# Tiling helper
# -----------------------------------------------------------------------------
def _pick_row_tile(Ho, H, stride):
    """Largest output-row tile that (a) divides Ho, (b) keeps the halo window
    inside the image (rows_pad <= H), and (c) leaves >= 4 row tiles when
    possible (more grid steps -> better pipelining / core balance)."""
    candidates = [d for d in range(1, Ho + 1)
                  if Ho % d == 0 and stride * (d - 1) + 3 <= H]
    assert candidates, "spatial size too small for the fused halo scheme"
    preferred = [d for d in candidates if Ho // d >= 4]
    return max(preferred) if preferred else max(candidates)


# -----------------------------------------------------------------------------
# Fused expand -> depthwise -> project kernel
# -----------------------------------------------------------------------------
def _make_fused_kernel(*, H, W, inp, ce, outp, stride, to, wo, rows_pad,
                       has_expand, residual, mxu_dtype):
    def _ds(start, size):
        # Strided ref read only when the conv stride requires it.
        return pl.ds(start, size) if stride == 1 else pl.ds(start, size, stride=stride)

    def kernel(*refs):
        if has_expand:
            (x_ref, we_ref, be_ref, wdw_ref, bdw_ref, wp_ref, bp_ref,
             out_ref, e_ref) = refs
        else:
            (x_ref, wdw_ref, bdw_ref, wp_ref, bp_ref, out_ref, e_ref) = refs
            we_ref = be_ref = None

        j = pl.program_id(1)

        # ---------------------------------------------------------------------
        # 1) Zero the halo scratch: its border rows/cols provide the depthwise
        #    conv's zero padding (which must be applied AFTER expand+BN+ReLU6).
        # ---------------------------------------------------------------------
        e_ref[...] = jnp.zeros_like(e_ref)

        # ---------------------------------------------------------------------
        # 2) Expand 1x1 conv + BN + ReLU6 for every input row this tile touches
        #    (tile rows + 1-row halo).  Boundary tiles read a clamped, fixed-size
        #    row window and land it at the matching scratch offset so that
        #    out-of-image rows stay zero.
        #    Scratch row i holds padded-activation row (p0 + i - 1).
        # ---------------------------------------------------------------------
        p0 = j * (stride * to)                    # first padded row this tile needs
        r_want = p0 - 1                           # first un-padded input row (may be -1)
        r_read = jnp.clip(r_want, 0, H - rows_pad)
        x_rows = x_ref[0, pl.ds(r_read, rows_pad), :, :]          # (rows_pad, W, inp)
        x2d = x_rows.reshape(rows_pad * W, inp)
        if has_expand:
            e = jnp.dot(x2d.astype(mxu_dtype), we_ref[...],
                        preferred_element_type=jnp.float32)
            e = jnp.clip(e + be_ref[...], 0.0, 6.0)
        else:
            e = x2d.astype(jnp.float32)
        dst = r_read - r_want + 1                 # scratch row of the first read row
        e_ref[pl.ds(dst, rows_pad), pl.ds(1, W), :] = e.reshape(rows_pad, W, ce)

        # ---------------------------------------------------------------------
        # 3) Depthwise 3x3 + BN + ReLU6 (f32 VPU math; BN scale pre-folded into
        #    the depthwise weights).  Taps are read straight from the VMEM
        #    scratch with (possibly strided) address slices.
        # ---------------------------------------------------------------------
        acc = jnp.zeros((to, wo, ce), jnp.float32)
        for di in range(3):
            for dj in range(3):
                tap = e_ref[_ds(di + 1, to), _ds(dj, wo), :]       # (to, wo, ce)
                acc = acc + tap * wdw_ref[di, dj, :]
        y = jnp.clip(acc + bdw_ref[0], 0.0, 6.0)

        # ---------------------------------------------------------------------
        # 4) Project 1x1 conv + BN (+ residual from the resident input block).
        # ---------------------------------------------------------------------
        y2d = y.reshape(to * wo, ce)
        out = jnp.dot(y2d.astype(mxu_dtype), wp_ref[...],
                      preferred_element_type=jnp.float32)
        out = out + bp_ref[...]
        if residual:
            # residual implies stride == 1 and inp == outp, so W == wo.
            res = x_ref[0, pl.ds(j * to, to), :, :]                # (to, W, inp)
            out = out + res.reshape(to * wo, outp).astype(jnp.float32)
        out_ref[...] = out.reshape(1, to, wo, outp).astype(out_ref.dtype)

    return kernel


# -----------------------------------------------------------------------------
# InvertedResidual forward (wrapper)
# -----------------------------------------------------------------------------
def inverted_residual_forward(x_nchw, params, *, inp, outp, stride, expand_ratio,
                              mxu_dtype=jnp.bfloat16):
    assert stride in (1, 2)
    residual = (stride == 1) and (inp == outp)
    N, C, H, W = x_nchw.shape
    assert C == inp
    ce = inp * expand_ratio
    Ho = (H + 2 - 3) // stride + 1
    Wo = (W + 2 - 3) // stride + 1
    to = _pick_row_tile(Ho, H, stride)
    n_row_tiles = Ho // to
    rows_pad = stride * (to - 1) + 3
    has_expand = expand_ratio != 1

    # NCHW -> NHWC (channels on the lane axis).
    x = jnp.transpose(x_nchw, (0, 2, 3, 1))

    # ---- fold eval-mode BN scales into the conv weights (w' = w * s) --------
    w_dw = (params["w_dw"] * params["s_dw"]).astype(jnp.float32)
    b_dw = params["b_dw"].reshape(1, ce).astype(jnp.float32)
    w_pr = (params["w_proj"] * params["s_proj"][None, :]).astype(mxu_dtype)
    b_pr = params["b_proj"].reshape(1, outp).astype(jnp.float32)

    inputs = [x]
    in_specs = [pl.BlockSpec((1, H, W, inp), lambda n, j: (n, 0, 0, 0))]
    if has_expand:
        w_ex = (params["w_expand"] * params["s_expand"][None, :]).astype(mxu_dtype)
        b_ex = params["b_expand"].reshape(1, ce).astype(jnp.float32)
        inputs += [w_ex, b_ex]
        in_specs += [pl.BlockSpec((inp, ce), lambda n, j: (0, 0)),
                     pl.BlockSpec((1, ce), lambda n, j: (0, 0))]
    inputs += [w_dw, b_dw, w_pr, b_pr]
    in_specs += [pl.BlockSpec((3, 3, ce), lambda n, j: (0, 0, 0)),
                 pl.BlockSpec((1, ce), lambda n, j: (0, 0)),
                 pl.BlockSpec((ce, outp), lambda n, j: (0, 0)),
                 pl.BlockSpec((1, outp), lambda n, j: (0, 0))]

    kernel = _make_fused_kernel(
        H=H, W=W, inp=inp, ce=ce, outp=outp, stride=stride, to=to, wo=Wo,
        rows_pad=rows_pad, has_expand=has_expand, residual=residual,
        mxu_dtype=mxu_dtype)

    out_nhwc = pl.pallas_call(
        kernel,
        out_shape=jax.ShapeDtypeStruct((N, Ho, Wo, outp), x.dtype),
        grid=(N, n_row_tiles),
        in_specs=in_specs,
        out_specs=pl.BlockSpec((1, to, Wo, outp), lambda n, j: (n, j, 0, 0)),
        scratch_shapes=[pltpu.VMEM((rows_pad + 2, W + 2, ce), jnp.float32)],
        compiler_params=pltpu.CompilerParams(
            dimension_semantics=("parallel", "parallel")),
    )(*inputs)

    # TODO(synk): for very small outp the final store is lane-sparse (outp<128);
    # a lane-dense (N*Ho, Wo*outp) output layout would need a minor-dim reshape
    # in-kernel, skipped here in favor of guaranteed lowering.

    # NHWC -> NCHW to match the PyTorch module's output convention.
    return jnp.transpose(out_nhwc, (0, 3, 1, 2))


# -----------------------------------------------------------------------------
# Deterministic parameter construction (BN folded to scale/bias, eval mode)
# -----------------------------------------------------------------------------
def make_params(key, inp, outp, expand_ratio, eps=1e-5):
    ce = inp * expand_ratio
    ks = jax.random.split(key, 12)

    def fold_bn(gamma, beta, mean, var):
        s = gamma / jnp.sqrt(var + eps)
        return s, beta - mean * s

    # expand 1x1: torch weight (ce, inp, 1, 1) -> (inp, ce)
    w_expand = 0.2 * jax.random.normal(ks[0], (inp, ce), jnp.float32)
    s_e, b_e = fold_bn(
        1.0 + 0.1 * jax.random.normal(ks[1], (ce,), jnp.float32),
        0.1 * jax.random.normal(ks[2], (ce,), jnp.float32),
        0.05 * jax.random.normal(ks[3], (ce,), jnp.float32),
        1.0 + 0.1 * jax.random.uniform(ks[4], (ce,), jnp.float32),
    )
    # depthwise 3x3: torch weight (ce, 1, 3, 3) -> (3, 3, ce)
    w_dw = 0.2 * jax.random.normal(ks[5], (3, 3, ce), jnp.float32)
    s_d, b_d = fold_bn(
        1.0 + 0.1 * jax.random.normal(ks[6], (ce,), jnp.float32),
        0.1 * jax.random.normal(ks[7], (ce,), jnp.float32),
        0.05 * jax.random.normal(ks[8], (ce,), jnp.float32),
        1.0 + 0.1 * jax.random.uniform(ks[9], (ce,), jnp.float32),
    )
    # project 1x1: torch weight (outp, ce, 1, 1) -> (ce, outp)
    w_proj = 0.2 * jax.random.normal(ks[10], (ce, outp), jnp.float32)
    s_p, b_p = fold_bn(
        jnp.ones((outp,), jnp.float32),
        0.05 * jax.random.normal(ks[11], (outp,), jnp.float32),
        jnp.zeros((outp,), jnp.float32),
        jnp.ones((outp,), jnp.float32),
    )
    return dict(w_expand=w_expand, s_expand=s_e, b_expand=b_e,
                w_dw=w_dw, s_dw=s_d, b_dw=b_d,
                w_proj=w_proj, s_proj=s_p, b_proj=b_p)


# -----------------------------------------------------------------------------
# Pure-JAX (f32) reference for sanity check
# -----------------------------------------------------------------------------
def reference_forward(x_nchw, params, *, inp, outp, stride, expand_ratio):
    x = jnp.transpose(x_nchw, (0, 2, 3, 1)).astype(jnp.float32)   # NHWC
    ce = inp * expand_ratio
    h = x
    if expand_ratio != 1:
        h = jnp.einsum("nhwc,cd->nhwd", h, params["w_expand"])
        h = jnp.clip(h * params["s_expand"] + params["b_expand"], 0.0, 6.0)
    # depthwise 3x3: rhs laid out HWIO with I=1 for feature_group_count=ce
    w = params["w_dw"][:, :, None, :]                              # (3, 3, 1, ce)
    h = jax.lax.conv_general_dilated(
        h, w, window_strides=(stride, stride), padding=((1, 1), (1, 1)),
        dimension_numbers=("NHWC", "HWIO", "NHWC"), feature_group_count=ce)
    h = jnp.clip(h * params["s_dw"] + params["b_dw"], 0.0, 6.0)
    h = jnp.einsum("nhwc,cd->nhwd", h, params["w_proj"])
    h = h * params["s_proj"] + params["b_proj"]
    if stride == 1 and inp == outp:
        h = h + x
    return jnp.transpose(h, (0, 3, 1, 2))


if __name__ == "__main__":
    key = jax.random.PRNGKey(0)

    test_cases = [
        # residual path (stride 1, inp == outp)
        dict(inp=8, outp=8, stride=1, expand_ratio=6, N=2, H=16, W=16),
        # downsampling path (stride 2, no residual)
        dict(inp=8, outp=16, stride=2, expand_ratio=6, N=2, H=16, W=16),
    ]

    for cfg in test_cases:
        key, kx, kp = jax.random.split(key, 3)
        N, H, W = cfg["N"], cfg["H"], cfg["W"]
        x = jax.random.normal(kx, (N, cfg["inp"], H, W), jnp.float32)
        params = make_params(kp, cfg["inp"], cfg["outp"], cfg["expand_ratio"])

        out = inverted_residual_forward(
            x, params, inp=cfg["inp"], outp=cfg["outp"],
            stride=cfg["stride"], expand_ratio=cfg["expand_ratio"])
        out = jax.block_until_ready(out)

        ref = jax.block_until_ready(reference_forward(
            x, params, inp=cfg["inp"], outp=cfg["outp"],
            stride=cfg["stride"], expand_ratio=cfg["expand_ratio"]))

        Ho = (H + 2 - 3) // cfg["stride"] + 1
        Wo = (W + 2 - 3) // cfg["stride"] + 1
        assert out.shape == (N, cfg["outp"], Ho, Wo), out.shape
        max_err = float(jnp.max(jnp.abs(out - ref)))
        # tolerance sized for bf16 MXU operands (f32 accumulation)
        assert jnp.allclose(out, ref, rtol=2e-2, atol=2e-2), max_err

    print("KERNEL_OK")
</pallas_src>

<mosaic_0001>
module attributes {stable_mosaic.version = 11 : i64} {
  func.func @kernel(%arg0: i32, %arg1: i32, %arg2: memref<1x16x16x8xf32, #tpu.memory_space<vmem>>, %arg3: memref<8x48xbf16, #tpu.memory_space<vmem>>, %arg4: memref<1x48xf32, #tpu.memory_space<vmem>>, %arg5: memref<3x3x48xf32, #tpu.memory_space<vmem>>, %arg6: memref<1x48xf32, #tpu.memory_space<vmem>>, %arg7: memref<48x8xbf16, #tpu.memory_space<vmem>>, %arg8: memref<1x8xf32, #tpu.memory_space<vmem>>, %arg9: memref<1x4x16x8xf32, #tpu.memory_space<vmem>>, %arg10: memref<8x18x48xf32, #tpu.memory_space<vmem>>) attributes {dimension_semantics = [#tpu.dimension_semantics<parallel>, #tpu.dimension_semantics<parallel>], iteration_bounds = array<i64: 2, 4>, scalar_prefetch = 0 : i64, scratch_operands = 1 : i64, tpu.core_type = #tpu.core_type<tc>, window_params = [{transform_indices = @transform_0, window_bounds = array<i64: 1, 16, 16, 8>}, {pipeline_mode = #tpu.pipeline_mode<synchronous>, transform_indices = @transform_1, window_bounds = array<i64: 8, 48>}, {pipeline_mode = #tpu.pipeline_mode<synchronous>, transform_indices = @transform_2, window_bounds = array<i64: 1, 48>}, {pipeline_mode = #tpu.pipeline_mode<synchronous>, transform_indices = @transform_3, window_bounds = array<i64: 3, 3, 48>}, {pipeline_mode = #tpu.pipeline_mode<synchronous>, transform_indices = @transform_4, window_bounds = array<i64: 1, 48>}, {pipeline_mode = #tpu.pipeline_mode<synchronous>, transform_indices = @transform_5, window_bounds = array<i64: 48, 8>}, {pipeline_mode = #tpu.pipeline_mode<synchronous>, transform_indices = @transform_6, window_bounds = array<i64: 1, 8>}, {transform_indices = @transform_7, window_bounds = array<i64: 1, 4, 16, 8>}]} {
    %cst = arith.constant 0.000000e+00 : f32
    %0 = vector.broadcast %cst : f32 to vector<8x18x48xf32>
    %c0 = arith.constant 0 : index
    %c0_0 = arith.constant 0 : index
    %c0_1 = arith.constant 0 : index
    %1 = vector.load %arg10[%c0, %c0_0, %c0_1] : memref<8x18x48xf32, #tpu.memory_space<vmem>>, vector<8x18x48xf32>
    tpu.vector_store %arg10[%c0, %c0_0, %c0_1], %0 {strides = array<i32>} : memref<8x18x48xf32, #tpu.memory_space<vmem>>, vector<8x18x48xf32>,
    %c4_i32 = arith.constant 4 : i32
    %2 = arith.muli %arg1, %c4_i32 : i32
    %c1_i32 = arith.constant 1 : i32
    %3 = arith.subi %2, %c1_i32 : i32
    %c0_i32 = arith.constant 0 : i32
    %c10_i32 = arith.constant 10 : i32
    %4 = arith.maxsi %c0_i32, %3 : i32
    %5 = arith.minsi %c10_i32, %4 : i32
    %c0_2 = arith.constant 0 : index
    %6 = arith.index_cast %5 : i32 to index
    %c0_3 = arith.constant 0 : index
    %c0_4 = arith.constant 0 : index
    %7 = vector.load %arg2[%c0_2, %6, %c0_3, %c0_4] : memref<1x16x16x8xf32, #tpu.memory_space<vmem>>, vector<1x6x16x8xf32>
    %8 = vector.shape_cast %7 : vector<1x6x16x8xf32> to vector<6x16x8xf32>
    %9 = vector.shape_cast %8 : vector<6x16x8xf32> to vector<96x8xf32>
    %10 = arith.truncf %9 : vector<96x8xf32> to vector<96x8xbf16>
    %c0_5 = arith.constant 0 : index
    %c0_6 = arith.constant 0 : index
    %11 = vector.load %arg3[%c0_5, %c0_6] : memref<8x48xbf16, #tpu.memory_space<vmem>>, vector<8x48xbf16>
    %cst_7 = arith.constant dense<0.000000e+00> : vector<96x48xf32>
    %12 = tpu.matmul %10, %11, %cst_7 {dimension_numbers = #tpu.dot_dimension_numbers<[1], [0], [0], [1], [0, 0, 1, 1], [], []>} : vector<96x8xbf16>, vector<8x48xbf16>, vector<96x48xf32> -> vector<96x48xf32>
    %c0_8 = arith.constant 0 : index
    %c0_9 = arith.constant 0 : index
    %13 = vector.load %arg4[%c0_8, %c0_9] : memref<1x48xf32, #tpu.memory_space<vmem>>, vector<1x48xf32>
    %14 = vector.broadcast %13 : vector<1x48xf32> to vector<96x48xf32>
    %15 = arith.addf %12, %14 : vector<96x48xf32>
    %cst_10 = arith.constant 0.000000e+00 : f32
    %cst_11 = arith.constant 6.000000e+00 : f32
    %16 = vector.broadcast %cst_10 : f32 to vector<96x48xf32>
    %17 = arith.maximumf %16, %15 : vector<96x48xf32>
    %18 = vector.broadcast %cst_11 : f32 to vector<96x48xf32>
    %19 = arith.minimumf %18, %17 : vector<96x48xf32>
    %20 = arith.subi %5, %3 : i32
    %c1_i32_12 = arith.constant 1 : i32
    %21 = arith.addi %20, %c1_i32_12 : i32
    %22 = vector.shape_cast %19 : vector<96x48xf32> to vector<6x16x48xf32>
    %23 = arith.index_cast %21 : i32 to index
    %c1 = arith.constant 1 : index
    %c0_13 = arith.constant 0 : index
    %24 = vector.load %arg10[%23, %c1, %c0_13] : memref<8x18x48xf32, #tpu.memory_space<vmem>>, vector<6x16x48xf32>
    tpu.vector_store %arg10[%23, %c1, %c0_13], %22 {strides = array<i32>} : memref<8x18x48xf32, #tpu.memory_space<vmem>>, vector<6x16x48xf32>,
    %cst_14 = arith.constant 0.000000e+00 : f32
    %25 = vector.broadcast %cst_14 : f32 to vector<4x16x48xf32>
    %c1_15 = arith.constant 1 : index
    %c0_16 = arith.constant 0 : index
    %c0_17 = arith.constant 0 : index
    %26 = vector.load %arg10[%c1_15, %c0_16, %c0_17] : memref<8x18x48xf32, #tpu.memory_space<vmem>>, vector<4x16x48xf32>
    %c0_18 = arith.constant 0 : index
    %c0_19 = arith.constant 0 : index
    %c0_20 = arith.constant 0 : index
    %27 = vector.load %arg5[%c0_18, %c0_19, %c0_20] : memref<3x3x48xf32, #tpu.memory_space<vmem>>, vector<1x1x48xf32>
    %28 = vector.shape_cast %27 : vector<1x1x48xf32> to vector<48xf32>
    %29 = vector.shape_cast %28 : vector<48xf32> to vector<1x1x48xf32>
    %30 = vector.broadcast %29 : vector<1x1x48xf32> to vector<4x16x48xf32>
    %31 = arith.mulf %26, %30 : vector<4x16x48xf32>
    %32 = arith.addf %25, %31 : vector<4x16x48xf32>
    %c1_21 = arith.constant 1 : index
    %c1_22 = arith.constant 1 : index
    %c0_23 = arith.constant 0 : index
    %33 = vector.load %arg10[%c1_21, %c1_22, %c0_23] : memref<8x18x48xf32, #tpu.memory_space<vmem>>, vector<4x16x48xf32>
    %c0_24 = arith.constant 0 : index
    %c1_25 = arith.constant 1 : index
    %c0_26 = arith.constant 0 : index
    %34 = vector.load %arg5[%c0_24, %c1_25, %c0_26] : memref<3x3x48xf32, #tpu.memory_space<vmem>>, vector<1x1x48xf32>
    %35 = vector.shape_cast %34 : vector<1x1x48xf32> to vector<48xf32>
    %36 = vector.shape_cast %35 : vector<48xf32> to vector<1x1x48xf32>
    %37 = vector.broadcast %36 : vector<1x1x48xf32> to vector<4x16x48xf32>
    %38 = arith.mulf %33, %37 : vector<4x16x48xf32>
    %39 = arith.addf %32, %38 : vector<4x16x48xf32>
    %c1_27 = arith.constant 1 : index
    %c2 = arith.constant 2 : index
    %c0_28 = arith.constant 0 : index
    %40 = vector.load %arg10[%c1_27, %c2, %c0_28] : memref<8x18x48xf32, #tpu.memory_space<vmem>>, vector<4x16x48xf32>
    %c0_29 = arith.constant 0 : index
    %c2_30 = arith.constant 2 : index
    %c0_31 = arith.constant 0 : index
    %41 = vector.load %arg5[%c0_29, %c2_30, %c0_31] : memref<3x3x48xf32, #tpu.memory_space<vmem>>, vector<1x1x48xf32>
    %42 = vector.shape_cast %41 : vector<1x1x48xf32> to vector<48xf32>
    %43 = vector.shape_cast %42 : vector<48xf32> to vector<1x1x48xf32>
    %44 = vector.broadcast %43 : vector<1x1x48xf32> to vector<4x16x48xf32>
    %45 = arith.mulf %40, %44 : vector<4x16x48xf32>
    %46 = arith.addf %39, %45 : vector<4x16x48xf32>
    %c2_32 = arith.constant 2 : index
    %c0_33 = arith.constant 0 : index
    %c0_34 = arith.constant 0 : index
    %47 = vector.load %arg10[%c2_32, %c0_33, %c0_34] : memref<8x18x48xf32, #tpu.memory_space<vmem>>, vector<4x16x48xf32>
    %c1_35 = arith.constant 1 : index
    %c0_36 = arith.constant 0 : index
    %c0_37 = arith.constant 0 : index
    %48 = vector.load %arg5[%c1_35, %c0_36, %c0_37] : memref<3x3x48xf32, #tpu.memory_space<vmem>>, vector<1x1x48xf32>
    %49 = vector.shape_cast %48 : vector<1x1x48xf32> to vector<48xf32>
    %50 = vector.shape_cast %49 : vector<48xf32> to vector<1x1x48xf32>
    %51 = vector.broadcast %50 : vector<1x1x48xf32> to vector<4x16x48xf32>
    %52 = arith.mulf %47, %51 : vector<4x16x48xf32>
    %53 = arith.addf %46, %52 : vector<4x16x48xf32>
    %c2_38 = arith.constant 2 : index
    %c1_39 = arith.constant 1 : index
    %c0_40 = arith.constant 0 : index
    %54 = vector.load %arg10[%c2_38, %c1_39, %c0_40] : memref<8x18x48xf32, #tpu.memory_space<vmem>>, vector<4x16x48xf32>
    %c1_41 = arith.constant 1 : index
    %c1_42 = arith.constant 1 : index
    %c0_43 = arith.constant 0 : index
    %55 = vector.load %arg5[%c1_41, %c1_42, %c0_43] : memref<3x3x48xf32, #tpu.memory_space<vmem>>, vector<1x1x48xf32>
    %56 = vector.shape_cast %55 : vector<1x1x48xf32> to vector<48xf32>
    %57 = vector.shape_cast %56 : vector<48xf32> to vector<1x1x48xf32>
    %58 = vector.broadcast %57 : vector<1x1x48xf32> to vector<4x16x48xf32>
    %59 = arith.mulf %54, %58 : vector<4x16x48xf32>
    %60 = arith.addf %53, %59 : vector<4x16x48xf32>
    %c2_44 = arith.constant 2 : index
    %c2_45 = arith.constant 2 : index
    %c0_46 = arith.constant 0 : index
    %61 = vector.load %arg10[%c2_44, %c2_45, %c0_46] : memref<8x18x48xf32, #tpu.memory_space<vmem>>, vector<4x16x48xf32>
    %c1_47 = arith.constant 1 : index
    %c2_48 = arith.constant 2 : index
    %c0_49 = arith.constant 0 : index
    %62 = vector.load %arg5[%c1_47, %c2_48, %c0_49] : memref<3x3x48xf32, #tpu.memory_space<vmem>>, vector<1x1x48xf32>
    %63 = vector.shape_cast %62 : vector<1x1x48xf32> to vector<48xf32>
    %64 = vector.shape_cast %63 : vector<48xf32> to vector<1x1x48xf32>
    %65 = vector.broadcast %64 : vector<1x1x48xf32> to vector<4x16x48xf32>
    %66 = arith.mulf %61, %65 : vector<4x16x48xf32>
    %67 = arith.addf %60, %66 : vector<4x16x48xf32>
    %c3 = arith.constant 3 : index
    %c0_50 = arith.constant 0 : index
    %c0_51 = arith.constant 0 : index
    %68 = vector.load %arg10[%c3, %c0_50, %c0_51] : memref<8x18x48xf32, #tpu.memory_space<vmem>>, vector<4x16x48xf32>
    %c2_52 = arith.constant 2 : index
    %c0_53 = arith.constant 0 : index
    %c0_54 = arith.constant 0 : index
    %69 = vector.load %arg5[%c2_52, %c0_53, %c0_54] : memref<3x3x48xf32, #tpu.memory_space<vmem>>, vector<1x1x48xf32>
    %70 = vector.shape_cast %69 : vector<1x1x48xf32> to vector<48xf32>
    %71 = vector.shape_cast %70 : vector<48xf32> to vector<1x1x48xf32>
    %72 = vector.broadcast %71 : vector<1x1x48xf32> to vector<4x16x48xf32>
    %73 = arith.mulf %68, %72 : vector<4x16x48xf32>
    %74 = arith.addf %67, %73 : vector<4x16x48xf32>
    %c3_55 = arith.constant 3 : index
    %c1_56 = arith.constant 1 : index
    %c0_57 = arith.constant 0 : index
    %75 = vector.load %arg10[%c3_55, %c1_56, %c0_57] : memref<8x18x48xf32, #tpu.memory_space<vmem>>, vector<4x16x48xf32>
    %c2_58 = arith.constant 2 : index
    %c1_59 = arith.constant 1 : index
    %c0_60 = arith.constant 0 : index
    %76 = vector.load %arg5[%c2_58, %c1_59, %c0_60] : memref<3x3x48xf32, #tpu.memory_space<vmem>>, vector<1x1x48xf32>
    %77 = vector.shape_cast %76 : vector<1x1x48xf32> to vector<48xf32>
    %78 = vector.shape_cast %77 : vector<48xf32> to vector<1x1x48xf32>
    %79 = vector.broadcast %78 : vector<1x1x48xf32> to vector<4x16x48xf32>
    %80 = arith.mulf %75, %79 : vector<4x16x48xf32>
    %81 = arith.addf %74, %80 : vector<4x16x48xf32>
    %c3_61 = arith.constant 3 : index
    %c2_62 = arith.constant 2 : index
    %c0_63 = arith.constant 0 : index
    %82 = vector.load %arg10[%c3_61, %c2_62, %c0_63] : memref<8x18x48xf32, #tpu.memory_space<vmem>>, vector<4x16x48xf32>
    %c2_64 = arith.constant 2 : index
    %c2_65 = arith.constant 2 : index
    %c0_66 = arith.constant 0 : index
    %83 = vector.load %arg5[%c2_64, %c2_65, %c0_66] : memref<3x3x48xf32, #tpu.memory_space<vmem>>, vector<1x1x48xf32>
    %84 = vector.shape_cast %83 : vector<1x1x48xf32> to vector<48xf32>
    %85 = vector.shape_cast %84 : vector<48xf32> to vector<1x1x48xf32>
    %86 = vector.broadcast %85 : vector<1x1x48xf32> to vector<4x16x48xf32>
    %87 = arith.mulf %82, %86 : vector<4x16x48xf32>
    %88 = arith.addf %81, %87 : vector<4x16x48xf32>
    %c0_67 = arith.constant 0 : index
    %c0_68 = arith.constant 0 : index
    %89 = vector.load %arg6[%c0_67, %c0_68] : memref<1x48xf32, #tpu.memory_space<vmem>>, vector<1x48xf32>
    %90 = vector.shape_cast %89 : vector<1x48xf32> to vector<48xf32>
    %91 = vector.shape_cast %90 : vector<48xf32> to vector<1x1x48xf32>
    %92 = vector.broadcast %91 : vector<1x1x48xf32> to vector<4x16x48xf32>
    %93 = arith.addf %88, %92 : vector<4x16x48xf32>
    %cst_69 = arith.constant 0.000000e+00 : f32
    %cst_70 = arith.constant 6.000000e+00 : f32
    %94 = vector.broadcast %cst_69 : f32 to vector<4x16x48xf32>
    %95 = arith.maximumf %94, %93 : vector<4x16x48xf32>
    %96 = vector.broadcast %cst_70 : f32 to vector<4x16x48xf32>
    %97 = arith.minimumf %96, %95 : vector<4x16x48xf32>
    %98 = vector.shape_cast %97 : vector<4x16x48xf32> to vector<64x48xf32>
    %99 = arith.truncf %98 : vector<64x48xf32> to vector<64x48xbf16>
    %c0_71 = arith.constant 0 : index
    %c0_72 = arith.constant 0 : index
    %100 = vector.load %arg7[%c0_71, %c0_72] : memref<48x8xbf16, #tpu.memory_space<vmem>>, vector<48x8xbf16>
    %cst_73 = arith.constant dense<0.000000e+00> : vector<64x8xf32>
    %101 = tpu.matmul %99, %100, %cst_73 {dimension_numbers = #tpu.dot_dimension_numbers<[1], [0], [0], [1], [0, 0, 1, 1], [], []>} : vector<64x48xbf16>, vector<48x8xbf16>, vector<64x8xf32> -> vector<64x8xf32>
    %c0_74 = arith.constant 0 : index
    %c0_75 = arith.constant 0 : index
    %102 = vector.load %arg8[%c0_74, %c0_75] : memref<1x8xf32, #tpu.memory_space<vmem>>, vector<1x8xf32>
    %103 = vector.broadcast %102 : vector<1x8xf32> to vector<64x8xf32>
    %104 = arith.addf %101, %103 : vector<64x8xf32>
    %c4_i32_76 = arith.constant 4 : i32
    %105 = arith.muli %arg1, %c4_i32_76 : i32
    %c0_77 = arith.constant 0 : index
    %106 = arith.index_cast %105 : i32 to index
    %c0_78 = arith.constant 0 : index
    %c0_79 = arith.constant 0 : index
    %107 = vector.load %arg2[%c0_77, %106, %c0_78, %c0_79] : memref<1x16x16x8xf32, #tpu.memory_space<vmem>>, vector<1x4x16x8xf32>
    %108 = vector.shape_cast %107 : vector<1x4x16x8xf32> to vector<4x16x8xf32>
    %109 = vector.shape_cast %108 : vector<4x16x8xf32> to vector<64x8xf32>
    %110 = arith.addf %104, %109 : vector<64x8xf32>
    %111 = vector.shape_cast %110 : vector<64x8xf32> to vector<1x4x16x8xf32>
    %c0_80 = arith.constant 0 : index
    %c0_81 = arith.constant 0 : index
    %c0_82 = arith.constant 0 : index
    %c0_83 = arith.constant 0 : index
    %112 = vector.load %arg9[%c0_80, %c0_81, %c0_82, %c0_83] : memref<1x4x16x8xf32, #tpu.memory_space<vmem>>, vector<1x4x16x8xf32>
    tpu.vector_store %arg9[%c0_80, %c0_81, %c0_82, %c0_83], %111 {strides = array<i32>} : memref<1x4x16x8xf32, #tpu.memory_space<vmem>>, vector<1x4x16x8xf32>,
    return
  }
  func.func @transform_0(%arg0: i32, %arg1: i32) -> (i32, i32, i32, i32) {
    %c0_i32 = arith.constant 0 : i32
    %c0_i32_0 = arith.constant 0 : i32
    %c0_i32_1 = arith.constant 0 : i32
    %c0_i32_2 = arith.constant 0 : i32
    return %arg0, %c0_i32, %c0_i32_0, %c0_i32_1 : i32, i32, i32, i32
  }
  func.func @transform_1(%arg0: i32, %arg1: i32) -> (i32, i32) {
    %c0_i32 = arith.constant 0 : i32
    %c0_i32_0 = arith.constant 0 : i32
    %c0_i32_1 = arith.constant 0 : i32
    return %c0_i32, %c0_i32_0 : i32, i32
  }
  func.func @transform_2(%arg0: i32, %arg1: i32) -> (i32, i32) {
    %c0_i32 = arith.constant 0 : i32
    %c0_i32_0 = arith.constant 0 : i32
    %c0_i32_1 = arith.constant 0 : i32
    return %c0_i32, %c0_i32_0 : i32, i32
  }
  func.func @transform_3(%arg0: i32, %arg1: i32) -> (i32, i32, i32) {
    %c0_i32 = arith.constant 0 : i32
    %c0_i32_0 = arith.constant 0 : i32
    %c0_i32_1 = arith.constant 0 : i32
    %c0_i32_2 = arith.constant 0 : i32
    return %c0_i32, %c0_i32_0, %c0_i32_1 : i32, i32, i32
  }
  func.func @transform_4(%arg0: i32, %arg1: i32) -> (i32, i32) {
    %c0_i32 = arith.constant 0 : i32
    %c0_i32_0 = arith.constant 0 : i32
    %c0_i32_1 = arith.constant 0 : i32
    return %c0_i32, %c0_i32_0 : i32, i32
  }
  func.func @transform_5(%arg0: i32, %arg1: i32) -> (i32, i32) {
    %c0_i32 = arith.constant 0 : i32
    %c0_i32_0 = arith.constant 0 : i32
    %c0_i32_1 = arith.constant 0 : i32
    return %c0_i32, %c0_i32_0 : i32, i32
  }
  func.func @transform_6(%arg0: i32, %arg1: i32) -> (i32, i32) {
    %c0_i32 = arith.constant 0 : i32
    %c0_i32_0 = arith.constant 0 : i32
    %c0_i32_1 = arith.constant 0 : i32
    return %c0_i32, %c0_i32_0 : i32, i32
  }
  func.func @transform_7(%arg0: i32, %arg1: i32) -> (i32, i32, i32, i32) {
    %c0_i32 = arith.constant 0 : i32
    %c0_i32_0 = arith.constant 0 : i32
    %c0_i32_1 = arith.constant 0 : i32
    return %arg0, %arg1, %c0_i32, %c0_i32_0 : i32, i32, i32, i32
  }
}

</mosaic_0001>

<llo_original>
// kernel: tpu_custom_call.1
$region0: #{tpu_custom_call.1}
  #allocation0 [shape = 'u32[]', space=smem, size = 0x4, offset = 0x4, fixed_abs, tag = 'smem constant byte address 0x4 - core index']
  #allocation1 [shape = 'u32[144,128]{1,0:T(1,128)}', space=vmem, size = 0x12000, scoped, tag = 'internal scratch']
  #allocation2 [shape = 'f32[8,18,48]{2,1,0:T(8,128)}', space=vmem, size = 0x18000, scoped, tag = 'scratch operand']
  %s0 = inlined_call_operand.vmem [shape: f32[2,16,16,8], index: 0, kind: input, shape index: {}]
  %s1 = inlined_call_operand.vmem [shape: bf16[8,48], index: 1, kind: input, shape index: {}]
  %s2 = inlined_call_operand.vmem [shape: f32[1,48], index: 2, kind: input, shape index: {}]
  %s3 = inlined_call_operand.vmem [shape: f32[3,3,48], index: 3, kind: input, shape index: {}]
  %s4 = inlined_call_operand.vmem [shape: f32[1,48], index: 4, kind: input, shape index: {}]
  %s5 = inlined_call_operand.vmem [shape: bf16[48,8], index: 5, kind: input, shape index: {}]
  %s6 = inlined_call_operand.vmem [shape: f32[1,8], index: 6, kind: input, shape index: {}]
  %s7 = inlined_call_operand.vmem [shape: f32[2,16,16,8], index: 7, kind: output, shape index: {}]
  %s8 = sld [smem:[#allocation0]]
  $region61: #{tpu_custom_call.1} parent=0
    _
  %s10 = ssub.s32 1, %s8
  %s11 = scalar_select 0, %s10, %s8
  loop: start=0, step=1, limit=10
  $region2: #{tpu_custom_call.1} parent=0 // loop_pre_header
    _
  $region3: #{tpu_custom_call.1} parent=0 // loop_header
    %s13 = sphi 0, %s17
    %p14 = scmp.ge.s32.totalorder %s13, 10
    %s20 = sphi 0, %s32
    %s21 = sphi 0, %s28
    %s22 = sphi 0, %s20
    %s23 = sphi 0, %s21
    %s24 = sphi 0, %s22
    %s25 = sphi 0, %s23
    %s35 = sphi 0, %s37
    %s38 = sphi 0, %s35
    %s39 = sphi 0, %s38
    %s55 = sphi 0, %s39
    %s59 = sphi 0, %s59
    %s61 = sphi 0, %s59
    %s62 = sphi 0, %s61
    %s76 = sphi 0, %s62
    %s80 = sphi 0, %s80
    %s82 = sphi 0, %s80
    %s83 = sphi 0, %s82
    %s97 = sphi 0, %s83
    %s101 = sphi 0, %s101
    %s103 = sphi 0, %s101
    %s104 = sphi 0, %s103
    %s118 = sphi 0, %s104
    %s122 = sphi 0, %s122
    %s124 = sphi 0, %s122
    %s125 = sphi 0, %s124
    %s139 = sphi 0, %s125
    %s143 = sphi 0, %s143
    %s145 = sphi 0, %s143
    %s146 = sphi 0, %s145
    %s160 = sphi 0, %s146
    %s164 = sphi 0, %s164
    %s166 = sphi 0, %s164
    %s167 = sphi 0, %s166
    %s181 = sphi 0, %s167
    %s189 = sphi 0, %s191
    %s192 = sphi 0, %s189
    %s193 = sphi 0, %s192
    %s209 = sphi 0, %s193
  $region4: #{tpu_custom_call.1} parent=0 // loop_header_branch
    %16 = sbr.rel (%p14) target = $region8
  $region5: #{tpu_custom_call.1} parent=0 // loop_body
    %s18 = ssub.s32 %s13, 1
    %s19 = ssub.s32 %s13, 2
    %s26 = sadd.s32 1, %s21
    %p27 = scmp.ge.s32.totalorder %s26, 4
    %s28 = scalar_select %p27, 0, %s26
    %s29 = sadd.s32 1, %s20
    %s30 = scalar_select %p27, %s29, %s20
    %p31 = scmp.ge.s32.totalorder %s30, 2
    %s32 = scalar_select %p31, 0, %s30
    %s33 = ssub.s32 %s20, %s32
    %p34 = scmp.eq.s32.totalorder %s33, 0
    %s36 = sadd.s32 %s35, 1
    %s37 = scalar_select %p34, %s35, %s36
    %p40 = pneg %p34
    %p41 = scmp.eq.s32.totalorder %s13, 7
    %p42 = por %p40, %p41
    %p43 = scmp.ne.s32.totalorder %s35, %s38
    %p44 = scmp.eq.s32.totalorder %s13, 0
    %p45 = por %p43, %p44
    %p46 = scmp.ne.s32.totalorder %s35, %s38
    %p47 = scmp.eq.s32.totalorder %s18, 7
    %p48 = por %p46, %p47
    %p49 = scmp.ne.s32.totalorder %s38, %s39
    %p50 = scmp.eq.s32.totalorder %s18, 0
    %p51 = por %p49, %p50
    %p52 = scmp.ne.s32.totalorder %s38, %s39
    %p53 = scmp.eq.s32.totalorder %s19, 7
    %p54 = por %p52, %p53
    %p56 = scmp.ne.s32.totalorder %s39, %s55
    %p57 = scmp.eq.s32.totalorder %s19, 0
    %p58 = por %p56, %p57
    %s60 = sadd.s32 %s59, 1
    %p63 = scmp.eq.s32.totalorder %s13, 7
    %p64 = scmp.ne.s32.totalorder %s59, %s61
    %p65 = scmp.eq.s32.totalorder %s13, 0
    %p66 = por %p64, %p65
    %p67 = scmp.ne.s32.totalorder %s59, %s61
    %p68 = scmp.eq.s32.totalorder %s18, 7
    %p69 = por %p67, %p68
    %p70 = scmp.ne.s32.totalorder %s61, %s62
    %p71 = scmp.eq.s32.totalorder %s18, 0
    %p72 = por %p70, %p71
    %p73 = scmp.ne.s32.totalorder %s61, %s62
    %p74 = scmp.eq.s32.totalorder %s19, 7
    %p75 = por %p73, %p74
    %p77 = scmp.ne.s32.totalorder %s62, %s76
    %p78 = scmp.eq.s32.totalorder %s19, 0
    %p79 = por %p77, %p78
    %s81 = sadd.s32 %s80, 1
    %p84 = scmp.eq.s32.totalorder %s13, 7
    %p85 = scmp.ne.s32.totalorder %s80, %s82
    %p86 = scmp.eq.s32.totalorder %s13, 0
    %p87 = por %p85, %p86
    %p88 = scmp.ne.s32.totalorder %s80, %s82
    %p89 = scmp.eq.s32.totalorder %s18, 7
    %p90 = por %p88, %p89
    %p91 = scmp.ne.s32.totalorder %s82, %s83
    %p92 = scmp.eq.s32.totalorder %s18, 0
    %p93 = por %p91, %p92
    %p94 = scmp.ne.s32.totalorder %s82, %s83
    %p95 = scmp.eq.s32.totalorder %s19, 7
    %p96 = por %p94, %p95
    %p98 = scmp.ne.s32.totalorder %s83, %s97
    %p99 = scmp.eq.s32.totalorder %s19, 0
    %p100 = por %p98, %p99
    %s102 = sadd.s32 %s101, 1
    %p105 = scmp.eq.s32.totalorder %s13, 7
    %p106 = scmp.ne.s32.totalorder %s101, %s103
    %p107 = scmp.eq.s32.totalorder %s13, 0
    %p108 = por %p106, %p107
    %p109 = scmp.ne.s32.totalorder %s101, %s103
    %p110 = scmp.eq.s32.totalorder %s18, 7
    %p111 = por %p109, %p110
    %p112 = scmp.ne.s32.totalorder %s103, %s104
    %p113 = scmp.eq.s32.totalorder %s18, 0
    %p114 = por %p112, %p113
    %p115 = scmp.ne.s32.totalorder %s103, %s104
    %p116 = scmp.eq.s32.totalorder %s19, 7
    %p117 = por %p115, %p116
    %p119 = scmp.ne.s32.totalorder %s104, %s118
    %p120 = scmp.eq.s32.totalorder %s19, 0
    %p121 = por %p119, %p120
    %s123 = sadd.s32 %s122, 1
    %p126 = scmp.eq.s32.totalorder %s13, 7
    %p127 = scmp.ne.s32.totalorder %s122, %s124
    %p128 = scmp.eq.s32.totalorder %s13, 0
    %p129 = por %p127, %p128
    %p130 = scmp.ne.s32.totalorder %s122, %s124
    %p131 = scmp.eq.s32.totalorder %s18, 7
    %p132 = por %p130, %p131
    %p133 = scmp.ne.s32.totalorder %s124, %s125
    %p134 = scmp.eq.s32.totalorder %s18, 0
    %p135 = por %p133, %p134
    %p136 = scmp.ne.s32.totalorder %s124, %s125
    %p137 = scmp.eq.s32.totalorder %s19, 7
    %p138 = por %p136, %p137
    %p140 = scmp.ne.s32.totalorder %s125, %s139
    %p141 = scmp.eq.s32.totalorder %s19, 0
    %p142 = por %p140, %p141
    %s144 = sadd.s32 %s143, 1
    %p147 = scmp.eq.s32.totalorder %s13, 7
    %p148 = scmp.ne.s32.totalorder %s143, %s145
    %p149 = scmp.eq.s32.totalorder %s13, 0
    %p150 = por %p148, %p149
    %p151 = scmp.ne.s32.totalorder %s143, %s145
    %p152 = scmp.eq.s32.totalorder %s18, 7
    %p153 = por %p151, %p152
    %p154 = scmp.ne.s32.totalorder %s145, %s146
    %p155 = scmp.eq.s32.totalorder %s18, 0
    %p156 = por %p154, %p155
    %p157 = scmp.ne.s32.totalorder %s145, %s146
    %p158 = scmp.eq.s32.totalorder %s19, 7
    %p159 = por %p157, %p158
    %p161 = scmp.ne.s32.totalorder %s146, %s160
    %p162 = scmp.eq.s32.totalorder %s19, 0
    %p163 = por %p161, %p162
    %s165 = sadd.s32 %s164, 1
    %p168 = scmp.eq.s32.totalorder %s13, 7
    %p169 = scmp.ne.s32.totalorder %s164, %s166
    %p170 = scmp.eq.s32.totalorder %s13, 0
    %p171 = por %p169, %p170
    %p172 = scmp.ne.s32.totalorder %s164, %s166
    %p173 = scmp.eq.s32.totalorder %s18, 7
    %p174 = por %p172, %p173
    %p175 = scmp.ne.s32.totalorder %s166, %s167
    %p176 = scmp.eq.s32.totalorder %s18, 0
    %p177 = por %p175, %p176
    %p178 = scmp.ne.s32.totalorder %s166, %s167
    %p179 = scmp.eq.s32.totalorder %s19, 7
    %p180 = por %p178, %p179
    %p182 = scmp.ne.s32.totalorder %s167, %s181
    %p183 = scmp.eq.s32.totalorder %s19, 0
    %p184 = por %p182, %p183
    %s185 = ssub.s32 %s20, %s32
    %s186 = ssub.s32 %s21, %s28
    %s187 = sor.u32 %s185, %s186
    %p188 = scmp.eq.s32.totalorder %s187, 0
    %s190 = sadd.s32 %s189, 1
    %s191 = scalar_select %p188, %s189, %s190
    %p194 = pneg %p188
    %p195 = scmp.eq.s32.totalorder %s13, 7
    %p196 = por %p194, %p195
    %p197 = scmp.ne.s32.totalorder %s189, %s192
    %p198 = scmp.eq.s32.totalorder %s13, 0
    %p199 = por %p197, %p198
    %p200 = scmp.ne.s32.totalorder %s189, %s192
    %p201 = scmp.eq.s32.totalorder %s18, 7
    %p202 = por %p200, %p201
    %p203 = scmp.ne.s32.totalorder %s192, %s193
    %p204 = scmp.eq.s32.totalorder %s18, 0
    %p205 = por %p203, %p204
    %p206 = scmp.ne.s32.totalorder %s192, %s193
    %p207 = scmp.eq.s32.totalorder %s19, 7
    %p208 = por %p206, %p207
    %p210 = scmp.ne.s32.totalorder %s193, %s209
    %p211 = scmp.eq.s32.totalorder %s19, 0
    %p212 = por %p210, %p211
    %p213 = scmp.le.s32.totalorder 1, %s13
    %p214 = scmp.lt.s32.totalorder %s13, 9
    %p215 = pnand %p213, %p214
    %p216 = pneg %p215
    // Predicated region
    $region9: #{tpu_custom_call.1} parent=5 // pred_check
      _
    $region10: #{tpu_custom_call.1} parent=5 // pred_check_branch
      %218 = sbr.rel (%p215) target = $region12
    $region11: #{tpu_custom_call.1} parent=5 // pred_region
      %s219 = ssub.s32 %s13, 1
      // Predicated region
      $region13: #{tpu_custom_call.1} parent=11 // pred_check
        %p220 = pneg %p72
      $region14: #{tpu_custom_call.1} parent=11 // pred_check_branch
        %222 = sbr.rel (%p220) target = $region16
      $region15: #{tpu_custom_call.1} parent=11 // pred_region
        _
      $region16: #{tpu_custom_call.1} parent=11 // pred_fallthru
        _
      // Predicated region
      $region17: #{tpu_custom_call.1} parent=11 // pred_check
        %p223 = pneg %p93
      $region18: #{tpu_custom_call.1} parent=11 // pred_check_branch
        %225 = sbr.rel (%p223) target = $region20
      $region19: #{tpu_custom_call.1} parent=11 // pred_region
        _
      $region20: #{tpu_custom_call.1} parent=11 // pred_fallthru
        _
      // Predicated region
      $region21: #{tpu_custom_call.1} parent=11 // pred_check
        %p226 = pneg %p114
      $region22: #{tpu_custom_call.1} parent=11 // pred_check_branch
        %228 = sbr.rel (%p226) target = $region24
      $region23: #{tpu_custom_call.1} parent=11 // pred_region
        _
      $region24: #{tpu_custom_call.1} parent=11 // pred_fallthru
        _
      // Predicated region
      $region25: #{tpu_custom_call.1} parent=11 // pred_check
        %p229 = pneg %p135
      $region26: #{tpu_custom_call.1} parent=11 // pred_check_branch
        %231 = sbr.rel (%p229) target = $region28
      $region27: #{tpu_custom_call.1} parent=11 // pred_region
        _
      $region28: #{tpu_custom_call.1} parent=11 // pred_fallthru
        _
      // Predicated region
      $region29: #{tpu_custom_call.1} parent=11 // pred_check
        %p232 = pneg %p156
      $region30: #{tpu_custom_call.1} parent=11 // pred_check_branch
        %234 = sbr.rel (%p232) target = $region32
      $region31: #{tpu_custom_call.1} parent=11 // pred_region
        _
      $region32: #{tpu_custom_call.1} parent=11 // pred_fallthru
        _
      // Predicated region
      $region33: #{tpu_custom_call.1} parent=11 // pred_check
        %p235 = pneg %p177
      $region34: #{tpu_custom_call.1} parent=11 // pred_check_branch
        %237 = sbr.rel (%p235) target = $region36
      $region35: #{tpu_custom_call.1} parent=11 // pred_region
        _
      $region36: #{tpu_custom_call.1} parent=11 // pred_fallthru
        _
    $region12: #{tpu_custom_call.1} parent=5 // pred_fallthru
      _
    %p238 = scmp.lt.s32.totalorder %s13, 8
    // Predicated region
    $region37: #{tpu_custom_call.1} parent=5 // pred_check
      %p239 = pneg %p238
    $region38: #{tpu_custom_call.1} parent=5 // pred_check_branch
      %241 = sbr.rel (%p239) target = $region40
    $region39: #{tpu_custom_call.1} parent=5 // pred_region
      // Predicated region
      $region41: #{tpu_custom_call.1} parent=39 // pred_check
        %p242 = pneg %p45
      $region42: #{tpu_custom_call.1} parent=39 // pred_check_branch
        %244 = sbr.rel (%p242) target = $region44
      $region43: #{tpu_custom_call.1} parent=39 // pred_region
        %p245 = scmp.lt.s32.totalorder %s20, 1
        %s246 = scalar_select %p245, %s20, 1
        %s247 = smul.addr %s246, 32
        %s248 = smul.addr %s247, 8
        %s249 = scalar_lea.vmem %s0, %s248
      $region44: #{tpu_custom_call.1} parent=39 // pred_fallthru
        _
    $region40: #{tpu_custom_call.1} parent=5 // pred_fallthru
      _
    %p250 = scmp.le.s32.totalorder 1, %s13
    %p251 = scmp.lt.s32.totalorder %s13, 9
    %p252 = pnand %p250, %p251
    %p253 = pneg %p252
    // Predicated region
    $region45: #{tpu_custom_call.1} parent=5 // pred_check
      _
    $region46: #{tpu_custom_call.1} parent=5 // pred_check_branch
      %255 = sbr.rel (%p252) target = $region48
    $region47: #{tpu_custom_call.1} parent=5 // pred_region
      %s256 = ssub.s32 %s13, 1
      %p257 = scmp.lt.s32.totalorder %s22, 1
      %s258 = scalar_select %p257, %s22, 1
      %s259 = smul.addr %s258, 32
      %s260 = smul.addr %s259, 8
      %s261 = scalar_lea.vmem %s0, %s260
      %p262 = pneg %p51
      %p263 = pneg %p48
      %p264 = pneg %p72
      %p265 = pneg %p69
      %p266 = pneg %p93
      %p267 = pneg %p90
      %p268 = pneg %p114
      %p269 = pneg %p111
      %p270 = pneg %p135
      %p271 = pneg %p132
      %p272 = pneg %p156
      %p273 = pneg %p153
      %p274 = pneg %p177
      %p275 = pneg %p174
      %p276 = pneg %p205
      %p277 = pneg %p202
      %s278 = smul.u32 4, %s23
      %p279 = scmp.lt.s32.totalorder %s22, 1
      %s280 = scalar_select %p279, %s22, 1
      %p281 = scmp.lt.s32.totalorder %s278, 15
      %s282 = scalar_select %p281, %s278, 15
      %s283 = smul.addr %s282, 2
      %s284 = smul.addr %s280, 32
      %s285 = sadd.s32 %s283, %s284
      %s286 = smul.addr %s285, 8
      %s287 = scalar_lea.vmem %s7, %s286
      %p288 = scmp.lt.s32.totalorder %s22, 1
      %s289 = scalar_select %p288, %s22, 1
      %s290 = smul.addr %s289, 32
      %s291 = smul.addr %s290, 8
      %s292 = scalar_lea.vmem %s0, %s291
      %s293 = smul.u32 4, %s23
      %p294 = scmp.lt.s32.totalorder %s22, 1
      %s295 = scalar_select %p294, %s22, 1
      %p296 = scmp.lt.s32.totalorder %s293, 15
      %s297 = scalar_select %p296, %s293, 15
      %s298 = smul.addr %s297, 2
      %s299 = smul.addr %s295, 32
      %s300 = sadd.s32 %s298, %s299
      %s301 = smul.addr %s300, 8
      %s302 = scalar_lea.vmem %s7, %s301
      %s303 = smul.u32 4, %s23
      %vm305 = vcmask 392192
      %306 = vst.msk [vmem:[#allocation2] sm:$0xff] %vm305, 0.0
      %307 = vst.msk [vmem:[#allocation2 + $0x8] sm:$0xff] %vm305, 0.0
      %vm308 = vcmask 386048
      %309 = vst.msk [vmem:[#allocation2 + $0x10] sm:$0x3] %vm308, 0.0
      %310 = vst.msk [vmem:[#allocation2 + $0x18] sm:$0xff] %vm305, 0.0
      %311 = vst.msk [vmem:[#allocation2 + $0x20] sm:$0xff] %vm305, 0.0
      %312 = vst.msk [vmem:[#allocation2 + $0x28] sm:$0x3] %vm308, 0.0
      %313 = vst.msk [vmem:[#allocation2 + $0x30] sm:$0xff] %vm305, 0.0
      %314 = vst.msk [vmem:[#allocation2 + $0x38] sm:$0xff] %vm305, 0.0
      %315 = vst.msk [vmem:[#allocation2 + $0x40] sm:$0x3] %vm308, 0.0
      %316 = vst.msk [vmem:[#allocation2 + $0x48] sm:$0xff] %vm305, 0.0
      %317 = vst.msk [vmem:[#allocation2 + $0x50] sm:$0xff] %vm305, 0.0
      %318 = vst.msk [vmem:[#allocation2 + $0x58] sm:$0x3] %vm308, 0.0
      %319 = vst.msk [vmem:[#allocation2 + $0x60] sm:$0xff] %vm305, 0.0
      %320 = vst.msk [vmem:[#allocation2 + $0x68] sm:$0xff] %vm305, 0.0
      %321 = vst.msk [vmem:[#allocation2 + $0x70] sm:$0x3] %vm308, 0.0
      %322 = vst.msk [vmem:[#allocation2 + $0x78] sm:$0xff] %vm305, 0.0
      %323 = vst.msk [vmem:[#allocation2 + $0x80] sm:$0xff] %vm305, 0.0
      %324 = vst.msk [vmem:[#allocation2 + $0x88] sm:$0x3] %vm308, 0.0
      %325 = vst.msk [vmem:[#allocation2 + $0x90] sm:$0xff] %vm305, 0.0
      %326 = vst.msk [vmem:[#allocation2 + $0x98] sm:$0xff] %vm305, 0.0
      %327 = vst.msk [vmem:[#allocation2 + $0xa0] sm:$0x3] %vm308, 0.0
      %328 = vst.msk [vmem:[#allocation2 + $0xa8] sm:$0xff] %vm305, 0.0
      %329 = vst.msk [vmem:[#allocation2 + $0xb0] sm:$0xff] %vm305, 0.0
      %330 = vst.msk [vmem:[#allocation2 + $0xb8] sm:$0x3] %vm308, 0.0
      %s331 = smul.u32 %s23, 4
      %s332 = ssub.s32 %s331, 1
      %p333 = scmp.gt.s32.totalorder %s332, 0
      %s334 = scalar_select %p333, %s332, 0
      %p335 = scmp.lt.s32.totalorder %s334, 10
      %s336 = scalar_select %p335, %s334, 10
      %s337 = smul.u32 %s336, 16
      %s338 = scalar_lea.vmem %s292, %s337
      %v339 = vld [vmem:[%s338] sm:$0xff]
      %v340 = vld [vmem:[%s338 + $0x8] sm:$0xff]
      %v341 = vld [vmem:[%s338 + $0x10] sm:$0xff]
      %v342 = vld [vmem:[%s338 + $0x18] sm:$0xff]
      %v343 = vld [vmem:[%s338 + $0x20] sm:$0xff]
      %v344 = vld [vmem:[%s338 + $0x28] sm:$0xff]
      %v345 = vld [vmem:[%s338 + $0x30] sm:$0xff]
      %v346 = vld [vmem:[%s338 + $0x38] sm:$0xff]
      %v347 = vld [vmem:[%s338 + $0x40] sm:$0xff]
      %v348 = vld [vmem:[%s338 + $0x48] sm:$0xff]
      %v349 = vld [vmem:[%s338 + $0x50] sm:$0xff]
      %v350 = vld [vmem:[%s338 + $0x58] sm:$0xff]
      %v351 = vpack.c.bf16 %v340, %v339
      %v352 = vpack.c.bf16 %v342, %v341
      %v353 = vpack.c.bf16 %v344, %v343
      %v354 = vpack.c.bf16 %v346, %v345
      %v355 = vpack.c.bf16 %v348, %v347
      %v356 = vpack.c.bf16 %v350, %v349
      %v357 = vld [vmem:[%s1] sm:$0xf]
      %v358 = vld [vmem:[%s2] sm:$0x1]
      %v360 = vlaneseq
      %v361 = vshrl.u32 %v360, 7
      %v362 = vsub.s32 0, %v361
      %v363 = vrot.slane %v358, %v362
      %vm365 = vcmask 64512
      %v367 = vsel %vm365, %v351, 0
      %v370 = vsel %vm365, %v352, 0
      %v373 = vsel %vm365, %v353, 0
      %v376 = vsel %vm365, %v354, 0
      %v379 = vsel %vm365, %v355, 0
      %v382 = vsel %vm365, %v356, 0
      %vm384 = vcmask 1043456
      %v386 = vsel %vm384, %v357, 0
      %388 = vmatprep.subr.bf16.mxu0 0
      %389 = vmatpush1.bf16.msra.mxu0 %v386
      %390 = vmatprep.subr.bf16.mxu0 0
      %391 = vmatpush1.bf16.msra.mxu0 0
      %392 = vmatprep.subr.bf16.mxu0 0
      %393 = vmatpush1.bf16.msra.mxu0 0
      %394 = vmatprep.subr.bf16.mxu0 0
      %395 = vmatpush1.bf16.msra.mxu0 0
      %396 = vmatprep.subr.bf16.mxu0 0
      %397 = vmatpush1.bf16.msra.mxu0 0
      %398 = vmatprep.subr.bf16.mxu0 0
      %399 = vmatpush1.bf16.msra.mxu0 0
      %400 = vmatprep.subr.bf16.mxu0 0
      %401 = vmatpush1.bf16.msra.mxu0 0
      %402 = vmatprep.subr.bf16.mxu0 0
      %403 = vmatpush1.bf16.msra.mxu0 0
      %404 = vmatprep.subr.bf16.mxu0 0
      %405 = vmatpush1.bf16.msra.mxu0 0
      %406 = vmatprep.subr.bf16.mxu0 0
      %407 = vmatpush1.bf16.msra.mxu0 0
      %408 = vmatprep.subr.bf16.mxu0 0
      %409 = vmatpush1.bf16.msra.mxu0 0
      %410 = vmatprep.subr.bf16.mxu0 0
      %411 = vmatpush1.bf16.msra.mxu0 0
      %412 = vmatprep.subr.bf16.mxu0 0
      %413 = vmatpush1.bf16.msra.mxu0 0
      %414 = vmatprep.subr.bf16.mxu0 0
      %415 = vmatpush1.bf16.msra.mxu0 0
      %416 = vmatprep.subr.bf16.mxu0 0
      %417 = vmatpush1.bf16.msra.mxu0 0
      %418 = vmatprep.subr.bf16.mxu0 0
      %419 = vmatpush1.bf16.msra.mxu0 0
      %420 = vmatprep.mubr.bf16.mxu0 0
      %421 = vmatmul.mubr.bf16.gmra.mrb[0].mxu0 %v367
      %v422 = vpop.f32.mrb[0].mxu0
      %v423 = vadd.f32 %v363, %v422
      %v424 = vpop.f32.mrb[0].mxu0
      %v425 = vpop.f32.mrb[0].mxu0
      %v426 = vadd.f32 %v363, %v425
      %v427 = vpop.f32.mrb[0].mxu0
      %428 = vmatprep.mubr.bf16.mxu0 0
      %429 = vmatmul.mubr.bf16.gmra.mrb[0].mxu0 %v370
      %v430 = vpop.f32.mrb[0].mxu0
      %v431 = vadd.f32 %v363, %v430
      %v432 = vpop.f32.mrb[0].mxu0
      %v433 = vpop.f32.mrb[0].mxu0
      %v434 = vadd.f32 %v363, %v433
      %v435 = vpop.f32.mrb[0].mxu0
      %436 = vmatprep.mubr.bf16.mxu0 0
      %437 = vmatmul.mubr.bf16.gmra.mrb[0].mxu0 %v373
      %v438 = vpop.f32.mrb[0].mxu0
      %v439 = vadd.f32 %v363, %v438
      %v440 = vpop.f32.mrb[0].mxu0
      %v441 = vpop.f32.mrb[0].mxu0
      %v442 = vadd.f32 %v363, %v441
      %v443 = vpop.f32.mrb[0].mxu0
      %444 = vmatprep.mubr.bf16.mxu0 0
      %445 = vmatmul.mubr.bf16.gmra.mrb[0].mxu0 %v376
      %v446 = vpop.f32.mrb[0].mxu0
      %v447 = vadd.f32 %v363, %v446
      %v448 = vpop.f32.mrb[0].mxu0
      %v449 = vpop.f32.mrb[0].mxu0
      %v450 = vadd.f32 %v363, %v449
      %v451 = vpop.f32.mrb[0].mxu0
      %452 = vmatprep.mubr.bf16.mxu0 0
      %453 = vmatmul.mubr.bf16.gmra.mrb[0].mxu0 %v379
      %v454 = vpop.f32.mrb[0].mxu0
      %v455 = vadd.f32 %v363, %v454
      %v456 = vpop.f32.mrb[0].mxu0
      %v457 = vpop.f32.mrb[0].mxu0
      %v458 = vadd.f32 %v363, %v457
      %v459 = vpop.f32.mrb[0].mxu0
      %460 = vmatprep.mubr.bf16.mxu0 0
      %461 = vmatmul.mubr.bf16.gmra.mrb[0].mxu0 %v382
      %v462 = vpop.f32.mrb[0].mxu0
      %v463 = vadd.f32 %v363, %v462
      %v464 = vpop.f32.mrb[0].mxu0
      %v465 = vpop.f32.mrb[0].mxu0
      %v466 = vadd.f32 %v363, %v465
      %v467 = vpop.f32.mrb[0].mxu0
      %468 = vdwg.mxu0
      %v469 = vmax.f32 %v423, 0.0
      %v470 = vmax.f32 %v426, 0.0
      %v471 = vmax.f32 %v431, 0.0
      %v472 = vmax.f32 %v434, 0.0
      %v473 = vmax.f32 %v439, 0.0
      %v474 = vmax.f32 %v442, 0.0
      %v475 = vmax.f32 %v447, 0.0
      %v476 = vmax.f32 %v450, 0.0
      %v477 = vmax.f32 %v455, 0.0
      %v478 = vmax.f32 %v458, 0.0
      %v479 = vmax.f32 %v463, 0.0
      %v480 = vmax.f32 %v466, 0.0
      %v481 = vmin.f32 %v469, 6.0
      %v482 = vmin.f32 %v470, 6.0
      %v483 = vmin.f32 %v471, 6.0
      %v484 = vmin.f32 %v472, 6.0
      %v485 = vmin.f32 %v473, 6.0
      %v486 = vmin.f32 %v474, 6.0
      %v487 = vmin.f32 %v475, 6.0
      %v488 = vmin.f32 %v476, 6.0
      %v489 = vmin.f32 %v477, 6.0
      %v490 = vmin.f32 %v478, 6.0
      %v491 = vmin.f32 %v479, 6.0
      %v492 = vmin.f32 %v480, 6.0
      %s493 = ssub.s32 %s336, %s332
      %s494 = sadd.s32 %s493, 1
      %s495 = smul.u32 %s494, 24
      %s496 = scalar_lea.vmem [#allocation2], %s495
      %497 = vst.msk [vmem:[%s496 + $0x1] sm:$0xff] %vm305, %v481
      %498 = vst.msk [vmem:[%s496 + $0x9] sm:$0xff] %vm305, %v482
      %499 = vst.msk [vmem:[%s496 + $0x19] sm:$0xff] %vm305, %v483
      %500 = vst.msk [vmem:[%s496 + $0x21] sm:$0xff] %vm305, %v484
      %501 = vst.msk [vmem:[%s496 + $0x31] sm:$0xff] %vm305, %v485
      %502 = vst.msk [vmem:[%s496 + $0x39] sm:$0xff] %vm305, %v486
      %503 = vst.msk [vmem:[%s496 + $0x49] sm:$0xff] %vm305, %v487
      %504 = vst.msk [vmem:[%s496 + $0x51] sm:$0xff] %vm305, %v488
      %505 = vst.msk [vmem:[%s496 + $0x61] sm:$0xff] %vm305, %v489
      %506 = vst.msk [vmem:[%s496 + $0x69] sm:$0xff] %vm305, %v490
      %507 = vst.msk [vmem:[%s496 + $0x79] sm:$0xff] %vm305, %v491
      %508 = vst.msk [vmem:[%s496 + $0x81] sm:$0xff] %vm305, %v492
      %s509 = scalar_lea.vmem [#allocation2], 24
      %v510 = vld [vmem:[%s509] sm:$0xff]
      %v511 = vld [vmem:[%s509 + $0x8] sm:$0xff]
      %v512 = vld [vmem:[%s509 + $0x18] sm:$0xff]
      %v513 = vld [vmem:[%s509 + $0x20] sm:$0xff]
      %v514 = vld [vmem:[%s509 + $0x30] sm:$0xff]
      %v515 = vld [vmem:[%s509 + $0x38] sm:$0xff]
      %v516 = vld [vmem:[%s509 + $0x48] sm:$0xff]
      %v517 = vld [vmem:[%s509 + $0x50] sm:$0xff]
      %v518 = vld [vmem:[%s3] sm:$0x1]
      %v519 = vlaneseq
      %v520 = vshrl.u32 %v519, 7
      %v521 = vsub.s32 0, %v520
      %v522 = vrot.slane %v518, %v521
      %v523 = vmul.f32 %v510, %v522
      %v524 = vmul.f32 %v511, %v522
      %v525 = vmul.f32 %v512, %v522
      %v526 = vmul.f32 %v513, %v522
      %v527 = vmul.f32 %v514, %v522
      %v528 = vmul.f32 %v515, %v522
      %v529 = vmul.f32 %v516, %v522
      %v530 = vmul.f32 %v517, %v522
      %v531 = vadd.f32 %v523, 0.0
      %v532 = vadd.f32 %v524, 0.0
      %v533 = vadd.f32 %v525, 0.0
      %v534 = vadd.f32 %v526, 0.0
      %v535 = vadd.f32 %v527, 0.0
      %v536 = vadd.f32 %v528, 0.0
      %v537 = vadd.f32 %v529, 0.0
      %v538 = vadd.f32 %v530, 0.0
      %v539 = vld [vmem:[%s509 + $0x1] sm:$0xff]
      %v540 = vld [vmem:[%s509 + $0x9] sm:$0xff]
      %v541 = vld [vmem:[%s509 + $0x19] sm:$0xff]
      %v542 = vld [vmem:[%s509 + $0x21] sm:$0xff]
      %v543 = vld [vmem:[%s509 + $0x31] sm:$0xff]
      %v544 = vld [vmem:[%s509 + $0x39] sm:$0xff]
      %v545 = vld [vmem:[%s509 + $0x49] sm:$0xff]
      %v546 = vld [vmem:[%s509 + $0x51] sm:$0xff]
      %v547 = vld [vmem:[%s3 + $0x1] sm:$0x1]
      %v548 = vlaneseq
      %v549 = vshrl.u32 %v548, 7
      %v550 = vsub.s32 0, %v549
      %v551 = vrot.slane %v547, %v550
      %v552 = vmul.f32 %v539, %v551
      %v553 = vmul.f32 %v540, %v551
      %v554 = vmul.f32 %v541, %v551
      %v555 = vmul.f32 %v542, %v551
      %v556 = vmul.f32 %v543, %v551
      %v557 = vmul.f32 %v544, %v551
      %v558 = vmul.f32 %v545, %v551
      %v559 = vmul.f32 %v546, %v551
      %v560 = vadd.f32 %v531, %v552
      %v561 = vadd.f32 %v532, %v553
      %v562 = vadd.f32 %v533, %v554
      %v563 = vadd.f32 %v534, %v555
      %v564 = vadd.f32 %v535, %v556
      %v565 = vadd.f32 %v536, %v557
      %v566 = vadd.f32 %v537, %v558
      %v567 = vadd.f32 %v538, %v559
      %v568 = vld [vmem:[%s509 + $0x2] sm:$0xff]
      %v569 = vld [vmem:[%s509 + $0xa] sm:$0xff]
      %v570 = vld [vmem:[%s509 + $0x1a] sm:$0xff]
      %v571 = vld [vmem:[%s509 + $0x22] sm:$0xff]
      %v572 = vld [vmem:[%s509 + $0x32] sm:$0xff]
      %v573 = vld [vmem:[%s509 + $0x3a] sm:$0xff]
      %v574 = vld [vmem:[%s509 + $0x4a] sm:$0xff]
      %v575 = vld [vmem:[%s509 + $0x52] sm:$0xff]
      %v576 = vld [vmem:[%s3 + $0x2] sm:$0x1]
      %v577 = vlaneseq
      %v578 = vshrl.u32 %v577, 7
      %v579 = vsub.s32 0, %v578
      %v580 = vrot.slane %v576, %v579
      %v581 = vmul.f32 %v568, %v580
      %v582 = vmul.f32 %v569, %v580
      %v583 = vmul.f32 %v570, %v580
      %v584 = vmul.f32 %v571, %v580
      %v585 = vmul.f32 %v572, %v580
      %v586 = vmul.f32 %v573, %v580
      %v587 = vmul.f32 %v574, %v580
      %v588 = vmul.f32 %v575, %v580
      %v589 = vadd.f32 %v560, %v581
      %v590 = vadd.f32 %v561, %v582
      %v591 = vadd.f32 %v562, %v583
      %v592 = vadd.f32 %v563, %v584
      %v593 = vadd.f32 %v564, %v585
      %v594 = vadd.f32 %v565, %v586
      %v595 = vadd.f32 %v566, %v587
      %v596 = vadd.f32 %v567, %v588
      %s597 = scalar_lea.vmem [#allocation2], 48
      %v598 = vld [vmem:[%s597] sm:$0xff]
      %v599 = vld [vmem:[%s597 + $0x8] sm:$0xff]
      %v600 = vld [vmem:[%s597 + $0x18] sm:$0xff]
      %v601 = vld [vmem:[%s597 + $0x20] sm:$0xff]
      %v602 = vld [vmem:[%s597 + $0x30] sm:$0xff]
      %v603 = vld [vmem:[%s597 + $0x38] sm:$0xff]
      %v604 = vld [vmem:[%s597 + $0x48] sm:$0xff]
      %v605 = vld [vmem:[%s597 + $0x50] sm:$0xff]
      %s606 = scalar_lea.vmem %s3, 4
      %v607 = vld [vmem:[%s606] sm:$0x1]
      %v608 = vlaneseq
      %v609 = vshrl.u32 %v608, 7
      %v610 = vsub.s32 0, %v609
      %v611 = vrot.slane %v607, %v610
      %v612 = vmul.f32 %v598, %v611
      %v613 = vmul.f32 %v599, %v611
      %v614 = vmul.f32 %v600, %v611
      %v615 = vmul.f32 %v601, %v611
      %v616 = vmul.f32 %v602, %v611
      %v617 = vmul.f32 %v603, %v611
      %v618 = vmul.f32 %v604, %v611
      %v619 = vmul.f32 %v605, %v611
      %v620 = vadd.f32 %v589, %v612
      %v621 = vadd.f32 %v590, %v613
      %v622 = vadd.f32 %v591, %v614
      %v623 = vadd.f32 %v592, %v615
      %v624 = vadd.f32 %v593, %v616
      %v625 = vadd.f32 %v594, %v617
      %v626 = vadd.f32 %v595, %v618
      %v627 = vadd.f32 %v596, %v619
      %v628 = vld [vmem:[%s597 + $0x1] sm:$0xff]
      %v629 = vld [vmem:[%s597 + $0x9] sm:$0xff]
      %v630 = vld [vmem:[%s597 + $0x19] sm:$0xff]
      %v631 = vld [vmem:[%s597 + $0x21] sm:$0xff]
      %v632 = vld [vmem:[%s597 + $0x31] sm:$0xff]
      %v633 = vld [vmem:[%s597 + $0x39] sm:$0xff]
      %v634 = vld [vmem:[%s597 + $0x49] sm:$0xff]
      %v635 = vld [vmem:[%s597 + $0x51] sm:$0xff]
      %v636 = vld [vmem:[%s606 + $0x1] sm:$0x1]
      %v637 = vlaneseq
      %v638 = vshrl.u32 %v637, 7
      %v639 = vsub.s32 0, %v638
      %v640 = vrot.slane %v636, %v639
      %v641 = vmul.f32 %v628, %v640
      %v642 = vmul.f32 %v629, %v640
      %v643 = vmul.f32 %v630, %v640
      %v644 = vmul.f32 %v631, %v640
      %v645 = vmul.f32 %v632, %v640
      %v646 = vmul.f32 %v633, %v640
      %v647 = vmul.f32 %v634, %v640
      %v648 = vmul.f32 %v635, %v640
      %v649 = vadd.f32 %v620, %v641
      %v650 = vadd.f32 %v621, %v642
      %v651 = vadd.f32 %v622, %v643
      %v652 = vadd.f32 %v623, %v644
      %v653 = vadd.f32 %v624, %v645
      %v654 = vadd.f32 %v625, %v646
      %v655 = vadd.f32 %v626, %v647
      %v656 = vadd.f32 %v627, %v648
      %v657 = vld [vmem:[%s597 + $0x2] sm:$0xff]
      %v658 = vld [vmem:[%s597 + $0xa] sm:$0xff]
      %v659 = vld [vmem:[%s597 + $0x1a] sm:$0xff]
      %v660 = vld [vmem:[%s597 + $0x22] sm:$0xff]
      %v661 = vld [vmem:[%s597 + $0x32] sm:$0xff]
      %v662 = vld [vmem:[%s597 + $0x3a] sm:$0xff]
      %v663 = vld [vmem:[%s597 + $0x4a] sm:$0xff]
      %v664 = vld [vmem:[%s597 + $0x52] sm:$0xff]
      %v665 = vld [vmem:[%s606 + $0x2] sm:$0x1]
      %v666 = vlaneseq
      %v667 = vshrl.u32 %v666, 7
      %v668 = vsub.s32 0, %v667
      %v669 = vrot.slane %v665, %v668
      %v670 = vmul.f32 %v657, %v669
      %v671 = vmul.f32 %v658, %v669
      %v672 = vmul.f32 %v659, %v669
      %v673 = vmul.f32 %v660, %v669
      %v674 = vmul.f32 %v661, %v669
      %v675 = vmul.f32 %v662, %v669
      %v676 = vmul.f32 %v663, %v669
      %v677 = vmul.f32 %v664, %v669
      %v678 = vadd.f32 %v649, %v670
      %v679 = vadd.f32 %v650, %v671
      %v680 = vadd.f32 %v651, %v672
      %v681 = vadd.f32 %v652, %v673
      %v682 = vadd.f32 %v653, %v674
      %v683 = vadd.f32 %v654, %v675
      %v684 = vadd.f32 %v655, %v676
      %v685 = vadd.f32 %v656, %v677
      %s686 = scalar_lea.vmem [#allocation2], 72
      %v687 = vld [vmem:[%s686] sm:$0xff]
      %v688 = vld [vmem:[%s686 + $0x8] sm:$0xff]
      %v689 = vld [vmem:[%s686 + $0x18] sm:$0xff]
      %v690 = vld [vmem:[%s686 + $0x20] sm:$0xff]
      %v691 = vld [vmem:[%s686 + $0x30] sm:$0xff]
      %v692 = vld [vmem:[%s686 + $0x38] sm:$0xff]
      %v693 = vld [vmem:[%s686 + $0x48] sm:$0xff]
      %v694 = vld [vmem:[%s686 + $0x50] sm:$0xff]
      %s695 = scalar_lea.vmem %s3, 8
      %v696 = vld [vmem:[%s695] sm:$0x1]
      %v697 = vlaneseq
      %v698 = vshrl.u32 %v697, 7
      %v699 = vsub.s32 0, %v698
      %v700 = vrot.slane %v696, %v699
      %v701 = vmul.f32 %v687, %v700
      %v702 = vmul.f32 %v688, %v700
      %v703 = vmul.f32 %v689, %v700
      %v704 = vmul.f32 %v690, %v700
      %v705 = vmul.f32 %v691, %v700
      %v706 = vmul.f32 %v692, %v700
      %v707 = vmul.f32 %v693, %v700
      %v708 = vmul.f32 %v694, %v700
      %v709 = vadd.f32 %v678, %v701
      %v710 = vadd.f32 %v679, %v702
      %v711 = vadd.f32 %v680, %v703
      %v712 = vadd.f32 %v681, %v704
      %v713 = vadd.f32 %v682, %v705
      %v714 = vadd.f32 %v683, %v706
      %v715 = vadd.f32 %v684, %v707
      %v716 = vadd.f32 %v685, %v708
      %v717 = vld [vmem:[%s686 + $0x1] sm:$0xff]
      %v718 = vld [vmem:[%s686 + $0x9] sm:$0xff]
      %v719 = vld [vmem:[%s686 + $0x19] sm:$0xff]
      %v720 = vld [vmem:[%s686 + $0x21] sm:$0xff]
      %v721 = vld [vmem:[%s686 + $0x31] sm:$0xff]
      %v722 = vld [vmem:[%s686 + $0x39] sm:$0xff]
      %v723 = vld [vmem:[%s686 + $0x49] sm:$0xff]
      %v724 = vld [vmem:[%s686 + $0x51] sm:$0xff]
      %v725 = vld [vmem:[%s695 + $0x1] sm:$0x1]
      %v726 = vlaneseq
      %v727 = vshrl.u32 %v726, 7
      %v728 = vsub.s32 0, %v727
      %v729 = vrot.slane %v725, %v728
      %v730 = vmul.f32 %v717, %v729
      %v731 = vmul.f32 %v718, %v729
      %v732 = vmul.f32 %v719, %v729
      %v733 = vmul.f32 %v720, %v729
      %v734 = vmul.f32 %v721, %v729
      %v735 = vmul.f32 %v722, %v729
      %v736 = vmul.f32 %v723, %v729
      %v737 = vmul.f32 %v724, %v729
      %v738 = vadd.f32 %v709, %v730
      %v739 = vadd.f32 %v710, %v731
      %v740 = vadd.f32 %v711, %v732
      %v741 = vadd.f32 %v712, %v733
      %v742 = vadd.f32 %v713, %v734
      %v743 = vadd.f32 %v714, %v735
      %v744 = vadd.f32 %v715, %v736
      %v745 = vadd.f32 %v716, %v737
      %v746 = vld [vmem:[%s686 + $0x2] sm:$0xff]
      %v747 = vld [vmem:[%s686 + $0xa] sm:$0xff]
      %v748 = vld [vmem:[%s686 + $0x1a] sm:$0xff]
      %v749 = vld [vmem:[%s686 + $0x22] sm:$0xff]
      %v750 = vld [vmem:[%s686 + $0x32] sm:$0xff]
      %v751 = vld [vmem:[%s686 + $0x3a] sm:$0xff]
      %v752 = vld [vmem:[%s686 + $0x4a] sm:$0xff]
      %v753 = vld [vmem:[%s686 + $0x52] sm:$0xff]
      %v754 = vld [vmem:[%s695 + $0x2] sm:$0x1]
      %v755 = vlaneseq
      %v756 = vshrl.u32 %v755, 7
      %v757 = vsub.s32 0, %v756
      %v758 = vrot.slane %v754, %v757
      %v759 = vmul.f32 %v746, %v758
      %v760 = vmul.f32 %v747, %v758
      %v761 = vmul.f32 %v748, %v758
      %v762 = vmul.f32 %v749, %v758
      %v763 = vmul.f32 %v750, %v758
      %v764 = vmul.f32 %v751, %v758
      %v765 = vmul.f32 %v752, %v758
      %v766 = vmul.f32 %v753, %v758
      %v767 = vadd.f32 %v738, %v759
      %v768 = vadd.f32 %v739, %v760
      %v769 = vadd.f32 %v740, %v761
      %v770 = vadd.f32 %v741, %v762
      %v771 = vadd.f32 %v742, %v763
      %v772 = vadd.f32 %v743, %v764
      %v773 = vadd.f32 %v744, %v765
      %v774 = vadd.f32 %v745, %v766
      %v775 = vld [vmem:[%s4] sm:$0x1]
      %v777 = vlaneseq
      %v778 = vshrl.u32 %v777, 7
      %v779 = vsub.s32 0, %v778
      %v780 = vrot.slane %v775, %v779
      %v782 = vadd.f32 %v767, %v780
      %v783 = vadd.f32 %v768, %v780
      %v784 = vadd.f32 %v769, %v780
      %v785 = vadd.f32 %v770, %v780
      %v786 = vadd.f32 %v771, %v780
      %v787 = vadd.f32 %v772, %v780
      %v788 = vadd.f32 %v773, %v780
      %v789 = vadd.f32 %v774, %v780
      %v790 = vmax.f32 %v782, 0.0
      %v791 = vmax.f32 %v783, 0.0
      %v792 = vmax.f32 %v784, 0.0
      %v793 = vmax.f32 %v785, 0.0
      %v794 = vmax.f32 %v786, 0.0
      %v795 = vmax.f32 %v787, 0.0
      %v796 = vmax.f32 %v788, 0.0
      %v797 = vmax.f32 %v789, 0.0
      %v798 = vmin.f32 %v790, 6.0
      %v799 = vmin.f32 %v791, 6.0
      %v800 = vmin.f32 %v792, 6.0
      %v801 = vmin.f32 %v793, 6.0
      %v802 = vmin.f32 %v794, 6.0
      %v803 = vmin.f32 %v795, 6.0
      %v804 = vmin.f32 %v796, 6.0
      %v805 = vmin.f32 %v797, 6.0
      %v806 = vpack.c.bf16 %v799, %v798
      %v807 = vpack.c.bf16 %v801, %v800
      %v808 = vpack.c.bf16 %v803, %v802
      %v809 = vpack.c.bf16 %v805, %v804
      %v810 = vld [vmem:[%s5] sm:$0xf]
      %v811 = vld [vmem:[%s5 + $0x4] sm:$0xf]
      %v812 = vld [vmem:[%s5 + $0x8] sm:$0xf]
      %v813 = vld [vmem:[%s5 + $0xc] sm:$0xf]
      %v814 = vld [vmem:[%s5 + $0x10] sm:$0xf]
      %v815 = vld [vmem:[%s5 + $0x14] sm:$0xf]
      %v816 = vld [vmem:[%s6] sm:$0x1]
      %v818 = vlaneseq
      %v819 = vshrl.u32 %v818, 7
      %v820 = vsub.s32 0, %v819
      %v821 = vrot.slane %v816, %v820
      %v829 = vunpack.c.l.b16 %v810
      %v830 = vunpack.c.l.b16 %v811
      %v831 = vunpack.c.l.b16 %v812
      %v832 = vunpack.c.l.b16 %v813
      %v833 = vunpack.c.l.b16 %v814
      %v834 = vunpack.c.l.b16 %v815
      %v835 = vpack.c.b16 %v830, %v829
      %v836 = vpack.c.b16 %v832, %v831
      %v837 = vpack.c.b16 %v834, %v833
      %v842 = vsel %vm305, %v806, 0
      %v845 = vsel %vm305, %v807, 0
      %v848 = vsel %vm305, %v808, 0
      %v851 = vsel %vm305, %v809, 0
      %853 = vmatprep.subr.bf16.mxu0 0
      %854 = vmatpush1.bf16.msra.mxu0 %v835
      %855 = vmatprep.subr.bf16.mxu0 0
      %856 = vmatpush1.bf16.msra.mxu0 %v836
      %857 = vmatprep.subr.bf16.mxu0 0
      %858 = vmatpush1.bf16.msra.mxu0 %v837
      %859 = vmatprep.subr.bf16.mxu0 0
      %860 = vmatpush1.bf16.msra.mxu0 0
      %861 = vmatprep.subr.bf16.mxu0 0
      %862 = vmatpush1.bf16.msra.mxu0 0
      %863 = vmatprep.subr.bf16.mxu0 0
      %864 = vmatpush1.bf16.msra.mxu0 0
      %865 = vmatprep.subr.bf16.mxu0 0
      %866 = vmatpush1.bf16.msra.mxu0 0
      %867 = vmatprep.subr.bf16.mxu0 0
      %868 = vmatpush1.bf16.msra.mxu0 0
      %869 = vmatprep.subr.bf16.mxu0 0
      %870 = vmatpush1.bf16.msra.mxu0 0
      %871 = vmatprep.subr.bf16.mxu0 0
      %872 = vmatpush1.bf16.msra.mxu0 0
      %873 = vmatprep.subr.bf16.mxu0 0
      %874 = vmatpush1.bf16.msra.mxu0 0
      %875 = vmatprep.subr.bf16.mxu0 0
      %876 = vmatpush1.bf16.msra.mxu0 0
      %877 = vmatprep.subr.bf16.mxu0 0
      %878 = vmatpush1.bf16.msra.mxu0 0
      %879 = vmatprep.subr.bf16.mxu0 0
      %880 = vmatpush1.bf16.msra.mxu0 0
      %881 = vmatprep.subr.bf16.mxu0 0
      %882 = vmatpush1.bf16.msra.mxu0 0
      %883 = vmatprep.subr.bf16.mxu0 0
      %884 = vmatpush1.bf16.msra.mxu0 0
      %885 = vmatprep.mubr.bf16.mxu0 0
      %886 = vmatmul.mubr.bf16.gmra.mrb[0].mxu0 %v842
      %v887 = vpop.f32.mrb[0].mxu0
      %v888 = vadd.f32 %v821, %v887
      %v889 = vpop.f32.mrb[0].mxu0
      %v890 = vpop.f32.mrb[0].mxu0
      %v891 = vadd.f32 %v821, %v890
      %v892 = vpop.f32.mrb[0].mxu0
      %893 = vmatprep.mubr.bf16.mxu0 0
      %894 = vmatmul.mubr.bf16.gmra.mrb[0].mxu0 %v845
      %v895 = vpop.f32.mrb[0].mxu0
      %v896 = vadd.f32 %v821, %v895
      %v897 = vpop.f32.mrb[0].mxu0
      %v898 = vpop.f32.mrb[0].mxu0
      %v899 = vadd.f32 %v821, %v898
      %v900 = vpop.f32.mrb[0].mxu0
      %901 = vmatprep.mubr.bf16.mxu0 0
      %902 = vmatmul.mubr.bf16.gmra.mrb[0].mxu0 %v848
      %v903 = vpop.f32.mrb[0].mxu0
      %v904 = vadd.f32 %v821, %v903
      %v905 = vpop.f32.mrb[0].mxu0
      %v906 = vpop.f32.mrb[0].mxu0
      %v907 = vadd.f32 %v821, %v906
      %v908 = vpop.f32.mrb[0].mxu0
      %909 = vmatprep.mubr.bf16.mxu0 0
      %910 = vmatmul.mubr.bf16.gmra.mrb[0].mxu0 %v851
      %v911 = vpop.f32.mrb[0].mxu0
      %v912 = vadd.f32 %v821, %v911
      %v913 = vpop.f32.mrb[0].mxu0
      %v914 = vpop.f32.mrb[0].mxu0
      %v915 = vadd.f32 %v821, %v914
      %v916 = vpop.f32.mrb[0].mxu0
      %917 = vdwg.mxu0
      %s918 = smul.u32 %s331, 16
      %s919 = scalar_lea.vmem %s292, %s918
      %v920 = vld [vmem:[%s919] sm:$0xff]
      %v921 = vld [vmem:[%s919 + $0x8] sm:$0xff]
      %v922 = vld [vmem:[%s919 + $0x10] sm:$0xff]
      %v923 = vld [vmem:[%s919 + $0x18] sm:$0xff]
      %v924 = vld [vmem:[%s919 + $0x20] sm:$0xff]
      %v925 = vld [vmem:[%s919 + $0x28] sm:$0xff]
      %v926 = vld [vmem:[%s919 + $0x30] sm:$0xff]
      %v927 = vld [vmem:[%s919 + $0x38] sm:$0xff]
      %v928 = vadd.f32 %v888, %v920
      %v929 = vadd.f32 %v891, %v921
      %v930 = vadd.f32 %v896, %v922
      %v931 = vadd.f32 %v899, %v923
      %v932 = vadd.f32 %v904, %v924
      %v933 = vadd.f32 %v907, %v925
      %v934 = vadd.f32 %v912, %v926
      %v935 = vadd.f32 %v915, %v927
      %936 = vst.msk [vmem:[%s302] sm:$0xff] %vm365, %v928
      %937 = vst.msk [vmem:[%s302 + $0x8] sm:$0xff] %vm365, %v929
      %938 = vst.msk [vmem:[%s302 + $0x10] sm:$0xff] %vm365, %v930
      %939 = vst.msk [vmem:[%s302 + $0x18] sm:$0xff] %vm365, %v931
      %940 = vst.msk [vmem:[%s302 + $0x20] sm:$0xff] %vm365, %v932
      %941 = vst.msk [vmem:[%s302 + $0x28] sm:$0xff] %vm365, %v933
      %942 = vst.msk [vmem:[%s302 + $0x30] sm:$0xff] %vm365, %v934
      %943 = vst.msk [vmem:[%s302 + $0x38] sm:$0xff] %vm365, %v935
      %s944 = smul.u32 4, %s23
      %p945 = scmp.lt.s32.totalorder %s22, 1
      %s946 = scalar_select %p945, %s22, 1
      %p947 = scmp.lt.s32.totalorder %s944, 15
      %s948 = scalar_select %p947, %s944, 15
      %s949 = smul.addr %s948, 2
      %s950 = smul.addr %s946, 32
      %s951 = sadd.s32 %s949, %s950
      %s952 = smul.addr %s951, 8
      %s953 = scalar_lea.vmem %s7, %s952
      // Predicated region
      $region49: #{tpu_custom_call.1} parent=47 // pred_check
        %p954 = pneg %p202
      $region50: #{tpu_custom_call.1} parent=47 // pred_check_branch
        %956 = sbr.rel (%p954) target = $region52
      $region51: #{tpu_custom_call.1} parent=47 // pred_region
        %s957 = smul.u32 4, %s23
      $region52: #{tpu_custom_call.1} parent=47 // pred_fallthru
        _
    $region48: #{tpu_custom_call.1} parent=5 // pred_fallthru
      _
    %p958 = scmp.le.s32.totalorder 2, %s13
    // Predicated region
    $region53: #{tpu_custom_call.1} parent=5 // pred_check
      %p959 = pneg %p958
    $region54: #{tpu_custom_call.1} parent=5 // pred_check_branch
      %961 = sbr.rel (%p959) target = $region56
    $region55: #{tpu_custom_call.1} parent=5 // pred_region
      %s962 = ssub.s32 %s13, 2
      // Predicated region
      $region57: #{tpu_custom_call.1} parent=55 // pred_check
        %p963 = pneg %p208
      $region58: #{tpu_custom_call.1} parent=55 // pred_check_branch
        %965 = sbr.rel (%p963) target = $region60
      $region59: #{tpu_custom_call.1} parent=55 // pred_region
        %s966 = smul.u32 4, %s25
        %p967 = scmp.lt.s32.totalorder %s24, 1
        %s968 = scalar_select %p967, %s24, 1
        %p969 = scmp.lt.s32.totalorder %s966, 15
        %s970 = scalar_select %p969, %s966, 15
        %s971 = smul.addr %s970, 2
        %s972 = smul.addr %s968, 32
        %s973 = sadd.s32 %s971, %s972
        %s974 = smul.addr %s973, 8
        %s975 = scalar_lea.vmem %s7, %s974
      $region60: #{tpu_custom_call.1} parent=55 // pred_fallthru
        _
    $region56: #{tpu_custom_call.1} parent=5 // pred_fallthru
      _
  $region6: #{tpu_custom_call.1} parent=0 // loop_footer
    %s17 = sadd.s32 1, %s13
  $region7: #{tpu_custom_call.1} parent=0 // loop_footer_branch
    %12 = sbr.rel target = $region3
  $region8: #{tpu_custom_call.1} parent=0 // loop_exit
    _

</llo_original>
